<compile_context>
chip_gen: v7x
topology: tpu7x:2x2x1
jax: 0.10.0
libtpu: 0.0.40
codegen_flags: <defaults>
</compile_context>

<pallas_src>
import jax
import jax.numpy as jnp
from jax.experimental import pallas as pl
from jax.experimental.pallas import tpu as pltpu

LANE = 128            # lane width: last dim of every block
MAX_TILE_ROWS = 1024  # 1024 x 128 x 4B = 512 KiB per block (x2 for double-buffer)


def _lj69_kernel(params_ref, x_ref, o_ref):
    # params_ref: (2,) f32 in SMEM -> [sigma, epsilon]
    sigma = params_ref[0]
    epsilon = params_ref[1]

    r = x_ref[...]                       # (tile_rows, LANE) f32, lane-dense
    s_over_r = sigma / r                 # one divide/elem (EUP slot)
    p3 = s_over_r * s_over_r * s_over_r  # (sigma/r)^3
    p6 = p3 * p3                         # (sigma/r)^6
    p9 = p6 * p3                         # (sigma/r)^9
    o_ref[...] = (4.0 * epsilon) * (p9 - p6)


def _round_up(a, b):
    return pl.cdiv(a, b) * b


def lj69_forward(x, sigma, epsilon, max_tile_rows=MAX_TILE_ROWS):
    """Elementwise LJ 6-9 potential: 4*eps*((sigma/x)**9 - (sigma/x)**6).

    x: any shape (float). sigma, epsilon: Python / 0-d scalars.
    Returns an array with the same shape as x (float32 compute).
    """
    orig_shape = x.shape
    flat = x.reshape(-1).astype(jnp.float32)
    n = flat.shape[0]

    # Lane-dense 2D layout: (rows, 128).  Only pad when n is not already a
    # multiple of the lane width (pad value 1.0 so throwaway lanes never
    # divide by zero); the common aligned case is zero-copy.
    lane_pad = _round_up(n, LANE) - n
    if lane_pad:
        flat = jnp.pad(flat, (0, lane_pad), constant_values=1.0)
    n_rows = flat.shape[0] // LANE
    x2d = flat.reshape(n_rows, LANE)

    # Row tile: one grid step for small inputs (rounded to the (8,128)
    # constraint), capped at max_tile_rows.  The grid uses cdiv, so the last
    # block may be partial -- no row padding / extra HBM copy needed.
    tile_rows = min(max_tile_rows, _round_up(n_rows, 8))
    grid = (pl.cdiv(n_rows, tile_rows),)

    params = jnp.array([sigma, epsilon], dtype=jnp.float32)  # SMEM scalars

    out2d = pl.pallas_call(
        _lj69_kernel,
        out_shape=jax.ShapeDtypeStruct((n_rows, LANE), jnp.float32),
        grid_spec=pltpu.PrefetchScalarGridSpec(
            num_scalar_prefetch=0,
            grid=grid,
            in_specs=[
                pl.BlockSpec(memory_space=pltpu.MemorySpace.SMEM),  # [sigma, eps]
                pl.BlockSpec((tile_rows, LANE), lambda i: (i, 0)),  # x tile
            ],
            out_specs=pl.BlockSpec((tile_rows, LANE), lambda i: (i, 0)),
        ),
        compiler_params=pltpu.CompilerParams(
            dimension_semantics=("parallel",)),
    )(params, x2d)

    # Strip any lane padding and restore the caller's shape.
    return out2d.reshape(-1)[:n].reshape(orig_shape)


def lj69_reference(x, sigma, epsilon):
    s_over_r = sigma / x
    return 4.0 * epsilon * (s_over_r ** 9 - s_over_r ** 6)


if __name__ == "__main__":
    key = jax.random.PRNGKey(0)
    kx, _ = jax.random.split(key)

    # Small example: an (8, 16) grid of pairwise distances (strictly positive).
    x = jax.random.uniform(kx, (8, 16), jnp.float32, minval=0.8, maxval=2.5)
    sigma = 1.0
    epsilon = 1.0

    y = lj69_forward(x, sigma, epsilon)
    y = jax.block_until_ready(y)

    y_ref = lj69_reference(x, sigma, epsilon)
    assert y.shape == x.shape, (y.shape, x.shape)
    assert jnp.allclose(y, y_ref, atol=1e-5, rtol=1e-5), "mismatch vs reference"

    print("KERNEL_OK")
</pallas_src>

<mosaic_0001>
module attributes {stable_mosaic.version = 11 : i64} {
  func.func @_lj69_kernel(%arg0: i32, %arg1: memref<2xf32, #tpu.memory_space<smem>>, %arg2: memref<8x128xf32, #tpu.memory_space<vmem>>, %arg3: memref<8x128xf32, #tpu.memory_space<vmem>>) attributes {dimension_semantics = [#tpu.dimension_semantics<parallel>], iteration_bounds = array<i64: 1>, scalar_prefetch = 0 : i64, scratch_operands = 0 : i64, tpu.core_type = #tpu.core_type<tc>, window_params = [{transform_indices = @transform_0, window_bounds = array<i64: 2>}, {transform_indices = @transform_1, window_bounds = array<i64: 8, 128>}, {transform_indices = @transform_2, window_bounds = array<i64: 8, 128>}]} {
    %c0 = arith.constant 0 : index
    %0 = memref.load %arg1[%c0] : memref<2xf32, #tpu.memory_space<smem>>
    %c1 = arith.constant 1 : index
    %1 = memref.load %arg1[%c1] : memref<2xf32, #tpu.memory_space<smem>>
    %c0_0 = arith.constant 0 : index
    %c0_1 = arith.constant 0 : index
    %2 = vector.load %arg2[%c0_0, %c0_1] : memref<8x128xf32, #tpu.memory_space<vmem>>, vector<8x128xf32>
    %3 = vector.broadcast %0 : f32 to vector<8x128xf32>
    %4 = arith.divf %3, %2 : vector<8x128xf32>
    %5 = arith.mulf %4, %4 : vector<8x128xf32>
    %6 = arith.mulf %5, %4 : vector<8x128xf32>
    %7 = arith.mulf %6, %6 : vector<8x128xf32>
    %8 = arith.mulf %7, %6 : vector<8x128xf32>
    %cst = arith.constant 4.000000e+00 : f32
    %9 = arith.mulf %cst, %1 : f32
    %10 = arith.subf %8, %7 : vector<8x128xf32>
    %11 = vector.broadcast %9 : f32 to vector<8x128xf32>
    %12 = arith.mulf %11, %10 : vector<8x128xf32>
    %c0_2 = arith.constant 0 : index
    %c0_3 = arith.constant 0 : index
    %13 = vector.load %arg3[%c0_2, %c0_3] : memref<8x128xf32, #tpu.memory_space<vmem>>, vector<8x128xf32>
    tpu.vector_store %arg3[%c0_2, %c0_3], %12 {strides = array<i32>} : memref<8x128xf32, #tpu.memory_space<vmem>>, vector<8x128xf32>,
    return
  }
  func.func @transform_0(%arg0: i32) -> i32 {
    %c0_i32 = arith.constant 0 : i32
    %c0_i32_0 = arith.constant 0 : i32
    return %c0_i32 : i32
  }
  func.func @transform_1(%arg0: i32) -> (i32, i32) {
    %c0_i32 = arith.constant 0 : i32
    %c0_i32_0 = arith.constant 0 : i32
    return %arg0, %c0_i32 : i32, i32
  }
  func.func @transform_2(%arg0: i32) -> (i32, i32) {
    %c0_i32 = arith.constant 0 : i32
    %c0_i32_0 = arith.constant 0 : i32
    return %arg0, %c0_i32 : i32, i32
  }
}

</mosaic_0001>

<llo_original>
// kernel: tpu_custom_call.1
$region0: #{tpu_custom_call.1}
  #allocation0 [shape = 'u32[]', space=smem, size = 0x4, offset = 0x4, fixed_abs, tag = 'smem constant byte address 0x4 - core index']
  #allocation1 [shape = 'u32[144,128]{1,0:T(1,128)}', space=vmem, size = 0x12000, scoped, tag = 'internal scratch']
  %s0 = inlined_call_operand.hbm [shape: f32[2], index: 0, kind: input, shape index: {}]
  %s1 = inlined_call_operand.vmem [shape: f32[1,128], index: 1, kind: input, shape index: {}]
  %s2 = inlined_call_operand.hbm [shape: f32[1,128], index: 2, kind: output, shape index: {}]
  %s3 = sld [smem:[#allocation0]]
  $region22: #{tpu_custom_call.1} parent=0
    _
  %s5 = ssub.s32 1, %s3
  %s6 = scalar_select 0, %s5, %s3
  $region1: #{tpu_custom_call.1} parent=0
    #allocation2 [shape = 'u8[512]{0}', space=smem, size = 0x200, scoped, tag = 'input window, operand 0, single buffered']
    #allocation3 [shape = 's32[1]{0}', space=sflag, size = 0x4, scoped, tag = 'scoped memory for tpu_custom_call.1']
    #allocation4 [shape = 's32[1]{0}', space=sflag, size = 0x4, scoped, tag = 'scoped memory for tpu_custom_call.1']
    #allocation5 [shape = 'u8[4096]{0}', space=vmem, size = 0x1000, scoped, tag = 'output window, operand 0, single buffered']
    %7 = vsyncpa [#allocation4], 0
    %8 = vsyncpa [#allocation3], 0
    // Predicated region
    $region2: #{tpu_custom_call.1} parent=1 // pred_check
      _
    $region3: #{tpu_custom_call.1} parent=1 // pred_check_branch
      %10 = sbr.rel (0) target = $region5
    $region4: #{tpu_custom_call.1} parent=1 // pred_region
      %s12 = ssub.s32 16, 16
      %13 = vsyncadd [#allocation4], %s12
      %16 = dma.hbm_to_smem %s0, 16, [#allocation2], [#allocation4]
    $region5: #{tpu_custom_call.1} parent=1 // pred_fallthru
      _
    // Predicated region
    $region6: #{tpu_custom_call.1} parent=1 // pred_check
      _
    $region7: #{tpu_custom_call.1} parent=1 // pred_check_branch
      %18 = sbr.rel (0) target = $region9
    $region8: #{tpu_custom_call.1} parent=1 // pred_region
      _
    $region9: #{tpu_custom_call.1} parent=1 // pred_fallthru
      _
    // Predicated region
    $region10: #{tpu_custom_call.1} parent=1 // pred_check
      _
    $region11: #{tpu_custom_call.1} parent=1 // pred_check_branch
      %20 = sbr.rel (0) target = $region13
    $region12: #{tpu_custom_call.1} parent=1 // pred_region
      %21 = dma.done [#allocation4], 16
    $region13: #{tpu_custom_call.1} parent=1 // pred_fallthru
      _
    %22 = sfence
    %s23 = sld [smem:[#allocation2]]
    %s24 = sld [smem:[#allocation2 + $0x1]]
    %v25 = vld [vmem:[%s1] sm:$0xff]
    %v26 = vstv %s23
    %v27 = vrcp.pop %v25
    %v28 = vmul.f32 %v26, %v27
    %v29 = vmul.f32 %v28, %v28
    %v30 = vmul.f32 %v29, %v28
    %v31 = vmul.f32 %v30, %v30
    %v32 = vmul.f32 %v31, %v30
    %s33 = smul.f32 %s24, 4.0
    %v34 = vsub.f32 %v32, %v31
    %v35 = vstv %s33
    %v36 = vmul.f32 %v35, %v34
    %37 = vst [vmem:[#allocation5] sm:$0xff] %v36
    // Predicated region
    $region14: #{tpu_custom_call.1} parent=1 // pred_check
      _
    $region15: #{tpu_custom_call.1} parent=1 // pred_check_branch
      %39 = sbr.rel (0) target = $region17
    $region16: #{tpu_custom_call.1} parent=1 // pred_region
      %s41 = ssub.s32 128, 16
      %42 = vsyncadd [#allocation3], %s41
      %s43 = sshll.u32 [#allocation5], 4
      %s44 = int_to_ptr.vmem [resolvable:$true] %s43
      %49 = dma.vmem_to_hbm [thread:$0]  %s44, 16, %s2, [#allocation3], 16, 16, 1
    $region17: #{tpu_custom_call.1} parent=1 // pred_fallthru
      _
    // Predicated region
    $region18: #{tpu_custom_call.1} parent=1 // pred_check
      _
    $region19: #{tpu_custom_call.1} parent=1 // pred_check_branch
      %51 = sbr.rel (0) target = $region21
    $region20: #{tpu_custom_call.1} parent=1 // pred_region
      %52 = dma.done [#allocation3], 128
    $region21: #{tpu_custom_call.1} parent=1 // pred_fallthru
      _
    %53 = vsyncpa [#allocation3], 1
    %54 = vsyncpa [#allocation4], 1

</llo_original>
